<compile_context>
chip_gen: v6e
topology: v6e:2x2x1
jax: 0.10.0
libtpu: 0.0.40
codegen_flags: <defaults>
</compile_context>

<pallas_src>
import jax
import jax.numpy as jnp
from jax.experimental import pallas as pl
from jax.experimental.pallas import tpu as pltpu


# ----------------------------------------------------------------------------
# Wrapper + kernel. One row-tile per grid step; the whole superposed layer
# bank (including bias) rides a single MXU matmul per tile.
# ----------------------------------------------------------------------------
def abstract_core_forward(core_embedding, selection_probs, recurrent_state,
                          params, *, row_tile=512, donate_state=False,
                          vmem_budget_bytes=48 * 1024 * 1024):
    """
    core_embedding:  (..., d_core)
    selection_probs: (..., K)     — SelectionSpec.selection_probabilities
    recurrent_state: (..., d_core)
    donate_state:    alias the new recurrent state onto the old state buffer
                     (caller must not reuse the passed-in state afterwards).
    returns (response (..., d_core), new_recurrent_state (..., d_core))
    """
    w_in, w_hid, bias = params["w_in"], params["w_hid"], params["bias"]
    K, D, _ = w_in.shape
    lead = core_embedding.shape[:-1]

    x = core_embedding.reshape(-1, D)
    h = recurrent_state.reshape(-1, D)
    p = selection_probs.reshape(-1, K)
    n = x.shape[0]

    kd = 2 * K * D                       # stacked [W_in; W_hid] contraction width
    kp = -(-K // 8) * 8                  # bias/p columns padded to sublane multiple
    ckd = kd + kp                        # total contraction width of the single dot
    op_dtype = core_embedding.dtype      # MXU operand dtype (no forced upcast)

    # (K, 2D, D) -> (2KD, D) stacked bank, then append zero-padded bias rows so
    # the bias superposition is folded into the same matmul.
    w_stack = jnp.concatenate([w_in, w_hid], axis=1).reshape(kd, D)
    b_pad = jnp.pad(bias, ((0, kp - K), (0, 0))).astype(w_stack.dtype)
    w_full = jnp.concatenate([w_stack, b_pad], axis=0)            # (ckd, D)

    p_pad = jnp.pad(p, ((0, 0), (0, kp - K)))                     # (n, kp)

    # ---- row-tile sizing under an explicit VMEM budget ---------------------
    def vmem_estimate(tn):
        bpe_in = jnp.dtype(op_dtype).itemsize
        bpe_w = jnp.dtype(w_full.dtype).itemsize
        bpe_o = (jnp.dtype(core_embedding.dtype).itemsize
                 + jnp.dtype(recurrent_state.dtype).itemsize)
        weights = ckd * D * bpe_w                     # resident, single-buffered
        tiles_in = 2 * tn * (2 * D + kp) * bpe_in     # x, h, p (double-buffered)
        tiles_out = 2 * tn * D * bpe_o                # two outputs (double-buffered)
        scratch = tn * ckd * bpe_in                   # matmul operand scratch
        temps = 2 * tn * D * 4                        # f32 pre-activation / h_new
        return weights + tiles_in + tiles_out + scratch + temps

    tile_n = n if n <= row_tile else row_tile
    while tile_n > 8 and vmem_estimate(tile_n) > vmem_budget_bytes:
        tile_n = max(8, tile_n // 2)
    grid = (pl.cdiv(n, tile_n),)
    vmem_limit = int(min(max(2 * vmem_estimate(tile_n), 16 * 2**20), 64 * 2**20))

    # ---- kernel -------------------------------------------------------------
    def core_kernel(x_ref, h_ref, p_ref, w_ref, out_ref, hnew_ref, op_ref):
        x_t = x_ref[...]
        h_t = h_ref[...]
        p_t = p_ref[...]
        # Build the p-folded operand in VMEM scratch (streams only x/h/p from
        # HBM; the fold is a single multiply in the operand dtype):
        #   op[:, 2Dk:2Dk+D]   = p_k * x
        #   op[:, 2Dk+D:2D(k+1)] = p_k * h
        #   op[:, 2KD:]        = p      (hits the appended bias rows of w_full)
        for k in range(K):                           # static unroll, K small
            pk = p_t[:, k:k + 1]
            op_ref[:, 2 * D * k:2 * D * k + D] = (pk * x_t).astype(op_ref.dtype)
            op_ref[:, 2 * D * k + D:2 * D * (k + 1)] = (pk * h_t).astype(op_ref.dtype)
        op_ref[:, kd:] = p_t.astype(op_ref.dtype)
        # Whole superposed layer bank + bias in ONE MXU matmul, f32 accumulate.
        pre = jnp.dot(op_ref[...], w_ref[...], preferred_element_type=jnp.float32)
        h_new = jnp.tanh(pre)                                      # EUP
        hnew_ref[...] = h_new.astype(hnew_ref.dtype)
        out_ref[...] = (x_t + h_new).astype(out_ref.dtype)         # residual

    grid_spec = pltpu.PrefetchScalarGridSpec(
        num_scalar_prefetch=0,
        grid=grid,
        in_specs=[
            pl.BlockSpec((tile_n, D), lambda i: (i, 0)),    # x   (row tile)
            pl.BlockSpec((tile_n, D), lambda i: (i, 0)),    # h   (row tile)
            pl.BlockSpec((tile_n, kp), lambda i: (i, 0)),   # p   (row tile, padded)
            # Grid-invariant weight bank: whole array resident in VMEM once,
            # single-buffered (no per-tile re-fetch, no second buffer).
            pl.BlockSpec(memory_space=pltpu.MemorySpace.VMEM),
        ],
        out_specs=[
            pl.BlockSpec((tile_n, D), lambda i: (i, 0)),    # response
            pl.BlockSpec((tile_n, D), lambda i: (i, 0)),    # new recurrent state
        ],
        scratch_shapes=[pltpu.VMEM((tile_n, ckd), op_dtype)],      # matmul operand
    )

    out, h_new = pl.pallas_call(
        core_kernel,
        out_shape=(jax.ShapeDtypeStruct((n, D), core_embedding.dtype),
                   jax.ShapeDtypeStruct((n, D), recurrent_state.dtype)),
        grid_spec=grid_spec,
        compiler_params=pltpu.CompilerParams(
            dimension_semantics=("parallel",),     # row tiles shard across TCs
            vmem_limit_bytes=vmem_limit),
        input_output_aliases=({1: 1} if donate_state else {}),
    )(x, h, p_pad, w_full)

    return out.reshape(*lead, D), h_new.reshape(*lead, D)


def create_state(batch_shape, d_core, dtype=jnp.float32):
    """Equivalent of AbstractComputationalCore.create_state: zero hidden state."""
    return jnp.zeros(tuple(batch_shape) + (d_core,), dtype=dtype)


def init_params(key, d_core, num_layers, dtype=jnp.float32):
    """Deterministic synthetic parameter bank (no checkpoint load)."""
    k1, k2, k3 = jax.random.split(key, 3)
    scale = 1.0 / jnp.sqrt(jnp.array(d_core, jnp.float32))
    return {
        "w_in":  (jax.random.normal(k1, (num_layers, d_core, d_core)) * scale).astype(dtype),
        "w_hid": (jax.random.normal(k2, (num_layers, d_core, d_core)) * scale).astype(dtype),
        "bias":  (jax.random.normal(k3, (num_layers, d_core)) * 0.01).astype(dtype),
    }


def _reference(core_embedding, selection_probs, recurrent_state, params):
    """Pure-JAX reference with identical semantics (f32 math)."""
    w_in = params["w_in"].astype(jnp.float32)
    w_hid = params["w_hid"].astype(jnp.float32)
    bias = params["bias"].astype(jnp.float32)
    x = core_embedding.astype(jnp.float32)
    h = recurrent_state.astype(jnp.float32)
    p = selection_probs.astype(jnp.float32)
    pre = (jnp.einsum("...k,...i,kij->...j", p, x, w_in)
           + jnp.einsum("...k,...i,kij->...j", p, h, w_hid)
           + jnp.einsum("...k,kj->...j", p, bias))
    h_new = jnp.tanh(pre)
    return x + h_new, h_new


if __name__ == "__main__":
    d_core = 32
    num_layers = 4          # size of the virtual layer bank
    batch, seq = 2, 8       # leading batch dims ("..." in the interface)

    key = jax.random.PRNGKey(0)
    k_emb, k_sel, k_par = jax.random.split(key, 3)

    params = init_params(k_par, d_core, num_layers, dtype=jnp.float32)
    core_embedding = jax.random.normal(k_emb, (batch, seq, d_core), jnp.float32)
    # SelectionSpec: per-token probability distribution over the layer bank.
    selection_probs = jax.nn.softmax(
        jax.random.normal(k_sel, (batch, seq, num_layers), jnp.float32), axis=-1)
    recurrent_state = create_state((batch, seq), d_core)

    # Reference computed up-front (independent of any buffer donation below).
    ref_out, ref_state = _reference(
        core_embedding, selection_probs, recurrent_state, params)

    # --- f32 path: tight correctness check against pure-JAX reference -------
    out, new_state = abstract_core_forward(
        core_embedding, selection_probs, recurrent_state, params)
    out = jax.block_until_ready(out)
    new_state = jax.block_until_ready(new_state)

    assert out.shape == (batch, seq, d_core)
    assert new_state.shape == (batch, seq, d_core)
    assert jnp.allclose(out, ref_out, atol=1e-5, rtol=1e-5)
    assert jnp.allclose(new_state, ref_state, atol=1e-5, rtol=1e-5)

    # --- bf16 path: native bf16 MXU operands + donated recurrent state ------
    params_bf16 = jax.tree_util.tree_map(
        lambda a: a.astype(jnp.bfloat16), params)
    state_bf16_in = create_state((batch, seq), d_core, dtype=jnp.bfloat16)
    out_bf16, state_bf16 = abstract_core_forward(
        core_embedding.astype(jnp.bfloat16),
        selection_probs.astype(jnp.bfloat16),
        state_bf16_in,
        params_bf16,
        donate_state=True)           # new state aliases the old state buffer
    out_bf16 = jax.block_until_ready(out_bf16)
    state_bf16 = jax.block_until_ready(state_bf16)
    assert out_bf16.dtype == jnp.bfloat16
    assert jnp.allclose(out_bf16.astype(jnp.float32), ref_out, atol=1e-1)
    assert jnp.allclose(state_bf16.astype(jnp.float32), ref_state, atol=1e-1)

    print("KERNEL_OK")
</pallas_src>

<mosaic_0001>
module attributes {stable_mosaic.version = 11 : i64} {
  func.func @core_kernel(%arg0: i32, %arg1: memref<16x32xf32, #tpu.memory_space<vmem>>, %arg2: memref<16x32xf32, #tpu.memory_space<vmem>>, %arg3: memref<16x8xf32, #tpu.memory_space<vmem>>, %arg4: memref<264x32xf32, #tpu.memory_space<vmem>>, %arg5: memref<16x32xf32, #tpu.memory_space<vmem>>, %arg6: memref<16x32xf32, #tpu.memory_space<vmem>>, %arg7: memref<16x264xf32, #tpu.memory_space<vmem>>) attributes {dimension_semantics = [#tpu.dimension_semantics<parallel>], iteration_bounds = array<i64: 1>, scalar_prefetch = 0 : i64, scratch_operands = 1 : i64, tpu.core_type = #tpu.core_type<tc>, window_params = [{transform_indices = @transform_0, window_bounds = array<i64: 16, 32>}, {transform_indices = @transform_1, window_bounds = array<i64: 16, 32>}, {transform_indices = @transform_2, window_bounds = array<i64: 16, 8>}, {pipeline_mode = #tpu.pipeline_mode<synchronous>, transform_indices = @transform_3, window_bounds = array<i64: 264, 32>}, {transform_indices = @transform_4, window_bounds = array<i64: 16, 32>}, {transform_indices = @transform_5, window_bounds = array<i64: 16, 32>}]} {
    %c0 = arith.constant 0 : index
    %c0_0 = arith.constant 0 : index
    %0 = vector.load %arg1[%c0, %c0_0] : memref<16x32xf32, #tpu.memory_space<vmem>>, vector<16x32xf32>
    %c0_1 = arith.constant 0 : index
    %c0_2 = arith.constant 0 : index
    %1 = vector.load %arg2[%c0_1, %c0_2] : memref<16x32xf32, #tpu.memory_space<vmem>>, vector<16x32xf32>
    %c0_3 = arith.constant 0 : index
    %c0_4 = arith.constant 0 : index
    %2 = vector.load %arg3[%c0_3, %c0_4] : memref<16x8xf32, #tpu.memory_space<vmem>>, vector<16x8xf32>
    %3 = vector.extract_strided_slice %2 {offsets = [0, 0], sizes = [16, 1], strides = [1, 1]} : vector<16x8xf32> to vector<16x1xf32>
    %4 = vector.broadcast %3 : vector<16x1xf32> to vector<16x32xf32>
    %5 = arith.mulf %4, %0 : vector<16x32xf32>
    %c0_5 = arith.constant 0 : index
    %c0_6 = arith.constant 0 : index
    %6 = vector.load %arg7[%c0_5, %c0_6] : memref<16x264xf32, #tpu.memory_space<vmem>>, vector<16x32xf32>
    tpu.vector_store %arg7[%c0_5, %c0_6], %5 {strides = array<i32>} : memref<16x264xf32, #tpu.memory_space<vmem>>, vector<16x32xf32>,
    %7 = vector.broadcast %3 : vector<16x1xf32> to vector<16x32xf32>
    %8 = arith.mulf %7, %1 : vector<16x32xf32>
    %c0_7 = arith.constant 0 : index
    %c32 = arith.constant 32 : index
    %9 = vector.load %arg7[%c0_7, %c32] : memref<16x264xf32, #tpu.memory_space<vmem>>, vector<16x32xf32>
    tpu.vector_store %arg7[%c0_7, %c32], %8 {strides = array<i32>} : memref<16x264xf32, #tpu.memory_space<vmem>>, vector<16x32xf32>,
    %10 = vector.extract_strided_slice %2 {offsets = [0, 1], sizes = [16, 1], strides = [1, 1]} : vector<16x8xf32> to vector<16x1xf32>
    %11 = vector.broadcast %10 : vector<16x1xf32> to vector<16x32xf32>
    %12 = arith.mulf %11, %0 : vector<16x32xf32>
    %c0_8 = arith.constant 0 : index
    %c64 = arith.constant 64 : index
    %13 = vector.load %arg7[%c0_8, %c64] : memref<16x264xf32, #tpu.memory_space<vmem>>, vector<16x32xf32>
    tpu.vector_store %arg7[%c0_8, %c64], %12 {strides = array<i32>} : memref<16x264xf32, #tpu.memory_space<vmem>>, vector<16x32xf32>,
    %14 = vector.broadcast %10 : vector<16x1xf32> to vector<16x32xf32>
    %15 = arith.mulf %14, %1 : vector<16x32xf32>
    %c0_9 = arith.constant 0 : index
    %c96 = arith.constant 96 : index
    %16 = vector.load %arg7[%c0_9, %c96] : memref<16x264xf32, #tpu.memory_space<vmem>>, vector<16x32xf32>
    tpu.vector_store %arg7[%c0_9, %c96], %15 {strides = array<i32>} : memref<16x264xf32, #tpu.memory_space<vmem>>, vector<16x32xf32>,
    %17 = vector.extract_strided_slice %2 {offsets = [0, 2], sizes = [16, 1], strides = [1, 1]} : vector<16x8xf32> to vector<16x1xf32>
    %18 = vector.broadcast %17 : vector<16x1xf32> to vector<16x32xf32>
    %19 = arith.mulf %18, %0 : vector<16x32xf32>
    %c0_10 = arith.constant 0 : index
    %c128 = arith.constant 128 : index
    %20 = vector.load %arg7[%c0_10, %c128] : memref<16x264xf32, #tpu.memory_space<vmem>>, vector<16x32xf32>
    tpu.vector_store %arg7[%c0_10, %c128], %19 {strides = array<i32>} : memref<16x264xf32, #tpu.memory_space<vmem>>, vector<16x32xf32>,
    %21 = vector.broadcast %17 : vector<16x1xf32> to vector<16x32xf32>
    %22 = arith.mulf %21, %1 : vector<16x32xf32>
    %c0_11 = arith.constant 0 : index
    %c160 = arith.constant 160 : index
    %23 = vector.load %arg7[%c0_11, %c160] : memref<16x264xf32, #tpu.memory_space<vmem>>, vector<16x32xf32>
    tpu.vector_store %arg7[%c0_11, %c160], %22 {strides = array<i32>} : memref<16x264xf32, #tpu.memory_space<vmem>>, vector<16x32xf32>,
    %24 = vector.extract_strided_slice %2 {offsets = [0, 3], sizes = [16, 1], strides = [1, 1]} : vector<16x8xf32> to vector<16x1xf32>
    %25 = vector.broadcast %24 : vector<16x1xf32> to vector<16x32xf32>
    %26 = arith.mulf %25, %0 : vector<16x32xf32>
    %c0_12 = arith.constant 0 : index
    %c192 = arith.constant 192 : index
    %27 = vector.load %arg7[%c0_12, %c192] : memref<16x264xf32, #tpu.memory_space<vmem>>, vector<16x32xf32>
    tpu.vector_store %arg7[%c0_12, %c192], %26 {strides = array<i32>} : memref<16x264xf32, #tpu.memory_space<vmem>>, vector<16x32xf32>,
    %28 = vector.broadcast %24 : vector<16x1xf32> to vector<16x32xf32>
    %29 = arith.mulf %28, %1 : vector<16x32xf32>
    %c0_13 = arith.constant 0 : index
    %c224 = arith.constant 224 : index
    %30 = vector.load %arg7[%c0_13, %c224] : memref<16x264xf32, #tpu.memory_space<vmem>>, vector<16x32xf32>
    tpu.vector_store %arg7[%c0_13, %c224], %29 {strides = array<i32>} : memref<16x264xf32, #tpu.memory_space<vmem>>, vector<16x32xf32>,
    %c0_14 = arith.constant 0 : index
    %c256 = arith.constant 256 : index
    %31 = vector.load %arg7[%c0_14, %c256] : memref<16x264xf32, #tpu.memory_space<vmem>>, vector<16x8xf32>
    tpu.vector_store %arg7[%c0_14, %c256], %2 {strides = array<i32>} : memref<16x264xf32, #tpu.memory_space<vmem>>, vector<16x8xf32>,
    %c0_15 = arith.constant 0 : index
    %c0_16 = arith.constant 0 : index
    %32 = vector.load %arg7[%c0_15, %c0_16] : memref<16x264xf32, #tpu.memory_space<vmem>>, vector<16x264xf32>
    %c0_17 = arith.constant 0 : index
    %c0_18 = arith.constant 0 : index
    %33 = vector.load %arg4[%c0_17, %c0_18] : memref<264x32xf32, #tpu.memory_space<vmem>>, vector<264x32xf32>
    %cst = arith.constant dense<0.000000e+00> : vector<16x32xf32>
    %34 = tpu.matmul %32, %33, %cst {dimension_numbers = #tpu.dot_dimension_numbers<[1], [0], [0], [1], [0, 0, 1, 1], [], []>} : vector<16x264xf32>, vector<264x32xf32>, vector<16x32xf32> -> vector<16x32xf32>
    %35 = math.tanh %34 : vector<16x32xf32>
    %c0_19 = arith.constant 0 : index
    %c0_20 = arith.constant 0 : index
    %36 = vector.load %arg6[%c0_19, %c0_20] : memref<16x32xf32, #tpu.memory_space<vmem>>, vector<16x32xf32>
    tpu.vector_store %arg6[%c0_19, %c0_20], %35 {strides = array<i32>} : memref<16x32xf32, #tpu.memory_space<vmem>>, vector<16x32xf32>,
    %37 = arith.addf %0, %35 : vector<16x32xf32>
    %c0_21 = arith.constant 0 : index
    %c0_22 = arith.constant 0 : index
    %38 = vector.load %arg5[%c0_21, %c0_22] : memref<16x32xf32, #tpu.memory_space<vmem>>, vector<16x32xf32>
    tpu.vector_store %arg5[%c0_21, %c0_22], %37 {strides = array<i32>} : memref<16x32xf32, #tpu.memory_space<vmem>>, vector<16x32xf32>,
    return
  }
  func.func @transform_0(%arg0: i32) -> (i32, i32) {
    %c0_i32 = arith.constant 0 : i32
    %c0_i32_0 = arith.constant 0 : i32
    return %arg0, %c0_i32 : i32, i32
  }
  func.func @transform_1(%arg0: i32) -> (i32, i32) {
    %c0_i32 = arith.constant 0 : i32
    %c0_i32_0 = arith.constant 0 : i32
    return %arg0, %c0_i32 : i32, i32
  }
  func.func @transform_2(%arg0: i32) -> (i32, i32) {
    %c0_i32 = arith.constant 0 : i32
    %c0_i32_0 = arith.constant 0 : i32
    return %arg0, %c0_i32 : i32, i32
  }
  func.func @transform_3(%arg0: i32) -> (i32, i32) {
    %c0_i32 = arith.constant 0 : i32
    %c0_i32_0 = arith.constant 0 : i32
    %c0_i32_1 = arith.constant 0 : i32
    return %c0_i32, %c0_i32_0 : i32, i32
  }
  func.func @transform_4(%arg0: i32) -> (i32, i32) {
    %c0_i32 = arith.constant 0 : i32
    %c0_i32_0 = arith.constant 0 : i32
    return %arg0, %c0_i32 : i32, i32
  }
  func.func @transform_5(%arg0: i32) -> (i32, i32) {
    %c0_i32 = arith.constant 0 : i32
    %c0_i32_0 = arith.constant 0 : i32
    return %arg0, %c0_i32 : i32, i32
  }
}

</mosaic_0001>

<llo_original>
// kernel: tpu_custom_call.1
$region0: #{tpu_custom_call.1}
  #allocation0 [shape = 'u32[]', space=smem, size = 0x4, offset = 0x4, fixed_abs, tag = 'smem constant byte address 0x4 - core index']
  #allocation1 [shape = 'u32[144,128]{1,0:T(1,128)}', space=vmem, size = 0x12000, scoped, tag = 'internal scratch']
  #allocation2 [shape = 'f32[16,264]{1,0:T(8,128)}', space=vmem, size = 0x6000, scoped, tag = 'scratch operand']
  %s0 = inlined_call_operand.vmem [shape: f32[16,32], index: 0, kind: input, shape index: {}]
  %s1 = inlined_call_operand.vmem [shape: f32[16,32], index: 1, kind: input, shape index: {}]
  %s2 = inlined_call_operand.vmem [shape: f32[16,8], index: 2, kind: input, shape index: {}]
  %s3 = inlined_call_operand.vmem [shape: f32[264,32], index: 3, kind: input, shape index: {}]
  %s4 = inlined_call_operand.hbm [shape: f32[16,32], index: 4, kind: output, shape index: {0}]
  %s5 = inlined_call_operand.hbm [shape: f32[16,32], index: 5, kind: output, shape index: {1}]
  %6 = xla_tuple %s4, %s5
  %s7 = sld [smem:[#allocation0]]
  $region34: #{tpu_custom_call.1} parent=0
    _
  %s9 = ssub.s32 1, %s7
  %s10 = scalar_select 0, %s9, %s7
  $region1: #{tpu_custom_call.1} parent=0
    #allocation3 [shape = 'u8[8192]{0}', space=vmem, size = 0x2000, scoped, tag = 'output window, operand 0, single buffered']
    #allocation4 [shape = 's32[1]{0}', space=sflag, size = 0x4, scoped, tag = 'scoped memory for tpu_custom_call.1']
    #allocation5 [shape = 'u8[8192]{0}', space=vmem, size = 0x2000, scoped, tag = 'output window, operand 1, single buffered']
    #allocation6 [shape = 's32[1]{0}', space=sflag, size = 0x4, scoped, tag = 'scoped memory for tpu_custom_call.1']
    %11 = vsyncpa [#allocation4], 0
    %12 = vsyncpa [#allocation6], 0
    // Predicated region
    $region2: #{tpu_custom_call.1} parent=1 // pred_check
      _
    $region3: #{tpu_custom_call.1} parent=1 // pred_check_branch
      %14 = sbr.rel (0) target = $region5
    $region4: #{tpu_custom_call.1} parent=1 // pred_region
      _
    $region5: #{tpu_custom_call.1} parent=1 // pred_fallthru
      _
    // Predicated region
    $region6: #{tpu_custom_call.1} parent=1 // pred_check
      _
    $region7: #{tpu_custom_call.1} parent=1 // pred_check_branch
      %16 = sbr.rel (0) target = $region9
    $region8: #{tpu_custom_call.1} parent=1 // pred_region
      _
    $region9: #{tpu_custom_call.1} parent=1 // pred_fallthru
      _
    // Predicated region
    $region10: #{tpu_custom_call.1} parent=1 // pred_check
      _
    $region11: #{tpu_custom_call.1} parent=1 // pred_check_branch
      %18 = sbr.rel (0) target = $region13
    $region12: #{tpu_custom_call.1} parent=1 // pred_region
      _
    $region13: #{tpu_custom_call.1} parent=1 // pred_fallthru
      _
    // Predicated region
    $region14: #{tpu_custom_call.1} parent=1 // pred_check
      _
    $region15: #{tpu_custom_call.1} parent=1 // pred_check_branch
      %20 = sbr.rel (0) target = $region17
    $region16: #{tpu_custom_call.1} parent=1 // pred_region
      _
    $region17: #{tpu_custom_call.1} parent=1 // pred_fallthru
      _
    %v21 = vld [vmem:[%s0] sm:$0xff]
    %v22 = vld [vmem:[%s0 + $0x8] sm:$0xff]
    %v23 = vld [vmem:[%s1] sm:$0xff]
    %v24 = vld [vmem:[%s1 + $0x8] sm:$0xff]
    %v25 = vld [vmem:[%s2] sm:$0xff]
    %v26 = vld [vmem:[%s2 + $0x8] sm:$0xff]
    %28 = vset.pattern.permute.xlu0 0
    %29 = vperm.xlu0 %28, %v25
    %v30 = vpop.permute.xlu0 %29
    %33 = vset.pattern.permute.xlu0 0
    %34 = vperm.xlu0 %33, %v26
    %v35 = vpop.permute.xlu0 %34
    %v37 = vmul.f32 %v30, %v21
    %v38 = vmul.f32 %v35, %v22
    %vm39 = vcmask 261120
    %40 = vst.msk [vmem:[#allocation2] sm:$0xff] %vm39, %v37
    %41 = vst.msk [vmem:[#allocation2 + $0x18] sm:$0xff] %vm39, %v38
    %v42 = vmul.f32 %v30, %v23
    %v43 = vmul.f32 %v35, %v24
    %46 = vrot.lane.b32.xlu0 %v42, 32
    %v47 = vpop.permute.xlu0 %46
    %48 = vrot.lane.b32.xlu0 %v43, 32
    %v49 = vpop.permute.xlu0 %48
    %vm52 = vcmask 523520
    %53 = vst.msk [vmem:[#allocation2] sm:$0xff] %vm52, %v47
    %54 = vst.msk [vmem:[#allocation2 + $0x18] sm:$0xff] %vm52, %v49
    %55 = vset.pattern.permute.xlu0 1
    %56 = vperm.xlu0 %55, %v25
    %v57 = vpop.permute.xlu0 %56
    %59 = vset.pattern.permute.xlu0 1
    %60 = vperm.xlu0 %59, %v26
    %v61 = vpop.permute.xlu0 %60
    %v63 = vmul.f32 %v57, %v21
    %v64 = vmul.f32 %v61, %v22
    %67 = vrot.lane.b32.xlu0 %v63, 64
    %v68 = vpop.permute.xlu0 %67
    %69 = vrot.lane.b32.xlu0 %v64, 64
    %v70 = vpop.permute.xlu0 %69
    %vm73 = vcmask 785920
    %74 = vst.msk [vmem:[#allocation2] sm:$0xff] %vm73, %v68
    %75 = vst.msk [vmem:[#allocation2 + $0x18] sm:$0xff] %vm73, %v70
    %v76 = vmul.f32 %v57, %v23
    %v77 = vmul.f32 %v61, %v24
    %80 = vrot.lane.b32.xlu0 %v76, 96
    %v81 = vpop.permute.xlu0 %80
    %82 = vrot.lane.b32.xlu0 %v77, 96
    %v83 = vpop.permute.xlu0 %82
    %vm86 = vcmask 1048320
    %87 = vst.msk [vmem:[#allocation2] sm:$0xff] %vm86, %v81
    %88 = vst.msk [vmem:[#allocation2 + $0x18] sm:$0xff] %vm86, %v83
    %89 = vset.pattern.permute.xlu0 2
    %90 = vperm.xlu0 %89, %v25
    %v91 = vpop.permute.xlu0 %90
    %93 = vset.pattern.permute.xlu0 2
    %94 = vperm.xlu0 %93, %v26
    %v95 = vpop.permute.xlu0 %94
    %v97 = vmul.f32 %v91, %v21
    %v98 = vmul.f32 %v95, %v22
    %99 = vst.msk [vmem:[#allocation2 + $0x8] sm:$0xff] %vm39, %v97
    %100 = vst.msk [vmem:[#allocation2 + $0x20] sm:$0xff] %vm39, %v98
    %v101 = vmul.f32 %v91, %v23
    %v102 = vmul.f32 %v95, %v24
    %105 = vrot.lane.b32.xlu0 %v101, 32
    %v106 = vpop.permute.xlu0 %105
    %107 = vrot.lane.b32.xlu0 %v102, 32
    %v108 = vpop.permute.xlu0 %107
    %111 = vst.msk [vmem:[#allocation2 + $0x8] sm:$0xff] %vm52, %v106
    %112 = vst.msk [vmem:[#allocation2 + $0x20] sm:$0xff] %vm52, %v108
    %113 = vset.pattern.permute.xlu0 3
    %114 = vperm.xlu0 %113, %v25
    %v115 = vpop.permute.xlu0 %114
    %117 = vset.pattern.permute.xlu0 3
    %118 = vperm.xlu0 %117, %v26
    %v119 = vpop.permute.xlu0 %118
    %v121 = vmul.f32 %v115, %v21
    %v122 = vmul.f32 %v119, %v22
    %125 = vrot.lane.b32.xlu0 %v121, 64
    %v126 = vpop.permute.xlu0 %125
    %127 = vrot.lane.b32.xlu0 %v122, 64
    %v128 = vpop.permute.xlu0 %127
    %131 = vst.msk [vmem:[#allocation2 + $0x8] sm:$0xff] %vm73, %v126
    %132 = vst.msk [vmem:[#allocation2 + $0x20] sm:$0xff] %vm73, %v128
    %v133 = vmul.f32 %v115, %v23
    %v134 = vmul.f32 %v119, %v24
    %137 = vrot.lane.b32.xlu0 %v133, 96
    %v138 = vpop.permute.xlu0 %137
    %139 = vrot.lane.b32.xlu0 %v134, 96
    %v140 = vpop.permute.xlu0 %139
    %143 = vst.msk [vmem:[#allocation2 + $0x8] sm:$0xff] %vm86, %v138
    %144 = vst.msk [vmem:[#allocation2 + $0x20] sm:$0xff] %vm86, %v140
    %vm145 = vcmask 64512
    %146 = vst.msk [vmem:[#allocation2 + $0x10] sm:$0xff] %vm145, %v25
    %147 = vst.msk [vmem:[#allocation2 + $0x28] sm:$0xff] %vm145, %v26
    %v148 = vld [vmem:[#allocation2] sm:$0xff]
    %v149 = vld [vmem:[#allocation2 + $0x8] sm:$0xff]
    %v150 = vld [vmem:[#allocation2 + $0x10] sm:$0xff]
    %v151 = vld [vmem:[#allocation2 + $0x18] sm:$0xff]
    %v152 = vld [vmem:[#allocation2 + $0x20] sm:$0xff]
    %v153 = vld [vmem:[#allocation2 + $0x28] sm:$0xff]
    %v154 = vld [vmem:[%s3] sm:$0xff]
    %v155 = vld [vmem:[%s3 + $0x8] sm:$0xff]
    %v156 = vld [vmem:[%s3 + $0x10] sm:$0xff]
    %v157 = vld [vmem:[%s3 + $0x18] sm:$0xff]
    %v158 = vld [vmem:[%s3 + $0x20] sm:$0xff]
    %v159 = vld [vmem:[%s3 + $0x28] sm:$0xff]
    %v160 = vld [vmem:[%s3 + $0x30] sm:$0xff]
    %v161 = vld [vmem:[%s3 + $0x38] sm:$0xff]
    %v162 = vld [vmem:[%s3 + $0x40] sm:$0xff]
    %v163 = vld [vmem:[%s3 + $0x48] sm:$0xff]
    %v164 = vld [vmem:[%s3 + $0x50] sm:$0xff]
    %v165 = vld [vmem:[%s3 + $0x58] sm:$0xff]
    %v166 = vld [vmem:[%s3 + $0x60] sm:$0xff]
    %v167 = vld [vmem:[%s3 + $0x68] sm:$0xff]
    %v168 = vld [vmem:[%s3 + $0x70] sm:$0xff]
    %v169 = vld [vmem:[%s3 + $0x78] sm:$0xff]
    %v170 = vld [vmem:[%s3 + $0x80] sm:$0xff]
    %v171 = vld [vmem:[%s3 + $0x88] sm:$0xff]
    %v172 = vld [vmem:[%s3 + $0x90] sm:$0xff]
    %v173 = vld [vmem:[%s3 + $0x98] sm:$0xff]
    %v174 = vld [vmem:[%s3 + $0xa0] sm:$0xff]
    %v175 = vld [vmem:[%s3 + $0xa8] sm:$0xff]
    %v176 = vld [vmem:[%s3 + $0xb0] sm:$0xff]
    %v177 = vld [vmem:[%s3 + $0xb8] sm:$0xff]
    %v178 = vld [vmem:[%s3 + $0xc0] sm:$0xff]
    %v179 = vld [vmem:[%s3 + $0xc8] sm:$0xff]
    %v180 = vld [vmem:[%s3 + $0xd0] sm:$0xff]
    %v181 = vld [vmem:[%s3 + $0xd8] sm:$0xff]
    %v182 = vld [vmem:[%s3 + $0xe0] sm:$0xff]
    %v183 = vld [vmem:[%s3 + $0xe8] sm:$0xff]
    %v184 = vld [vmem:[%s3 + $0xf0] sm:$0xff]
    %v185 = vld [vmem:[%s3 + $0xf8] sm:$0xff]
    %v186 = vld [vmem:[%s3 + $0x100] sm:$0xff]
    %v188 = vsel %vm145, %v150, 0
    %v191 = vsel %vm145, %v153, 0
    %193 = vmatprep.subr.mxu0 0.0
    %194 = vmatpush1.msra.mxu0 %v169
    %195 = vmatprep.subr.mxu0 0.0
    %196 = vmatpush1.msra.mxu0 %v168
    %197 = vmatprep.subr.mxu0 0.0
    %198 = vmatpush1.msra.mxu0 %v167
    %199 = vmatprep.subr.mxu0 0.0
    %200 = vmatpush1.msra.mxu0 %v166
    %201 = vmatprep.subr.mxu0 0.0
    %202 = vmatpush1.msra.mxu0 %v165
    %203 = vmatprep.subr.mxu0 0.0
    %204 = vmatpush1.msra.mxu0 %v164
    %205 = vmatprep.subr.mxu0 0.0
    %206 = vmatpush1.msra.mxu0 %v163
    %207 = vmatprep.subr.mxu0 0.0
    %208 = vmatpush1.msra.mxu0 %v162
    %209 = vmatprep.subr.mxu0 0.0
    %210 = vmatpush1.msra.mxu0 %v161
    %211 = vmatprep.subr.mxu0 0.0
    %212 = vmatpush1.msra.mxu0 %v160
    %213 = vmatprep.subr.mxu0 0.0
    %214 = vmatpush1.msra.mxu0 %v159
    %215 = vmatprep.subr.mxu0 0.0
    %216 = vmatpush1.msra.mxu0 %v158
    %217 = vmatprep.subr.mxu0 0.0
    %218 = vmatpush1.msra.mxu0 %v157
    %219 = vmatprep.subr.mxu0 0.0
    %220 = vmatpush1.msra.mxu0 %v156
    %221 = vmatprep.subr.mxu0 0.0
    %222 = vmatpush1.msra.mxu0 %v155
    %223 = vmatprep.subr.mxu0 0.0
    %224 = vmatpush1.msra.mxu0 %v154
    %225 = vmatprep.subr.mxu0 0.0
    %226 = vmatpush2.msra.mxu0 %v185
    %227 = vmatprep.subr.mxu0 0.0
    %228 = vmatpush2.msra.mxu0 %v184
    %229 = vmatprep.subr.mxu0 0.0
    %230 = vmatpush2.msra.mxu0 %v183
    %231 = vmatprep.subr.mxu0 0.0
    %232 = vmatpush2.msra.mxu0 %v182
    %233 = vmatprep.subr.mxu0 0.0
    %234 = vmatpush2.msra.mxu0 %v181
    %235 = vmatprep.subr.mxu0 0.0
    %236 = vmatpush2.msra.mxu0 %v180
    %237 = vmatprep.subr.mxu0 0.0
    %238 = vmatpush2.msra.mxu0 %v179
    %239 = vmatprep.subr.mxu0 0.0
    %240 = vmatpush2.msra.mxu0 %v178
    %241 = vmatprep.subr.mxu0 0.0
    %242 = vmatpush2.msra.mxu0 %v177
    %243 = vmatprep.subr.mxu0 0.0
    %244 = vmatpush2.msra.mxu0 %v176
    %245 = vmatprep.subr.mxu0 0.0
    %246 = vmatpush2.msra.mxu0 %v175
    %247 = vmatprep.subr.mxu0 0.0
    %248 = vmatpush2.msra.mxu0 %v174
    %249 = vmatprep.subr.mxu0 0.0
    %250 = vmatpush2.msra.mxu0 %v173
    %251 = vmatprep.subr.mxu0 0.0
    %252 = vmatpush2.msra.mxu0 %v172
    %253 = vmatprep.subr.mxu0 0.0
    %254 = vmatpush2.msra.mxu0 %v171
    %255 = vmatprep.subr.mxu0 0.0
    %256 = vmatpush2.msra.mxu0 %v170
    %257 = vmatprep.mubr.f32.mxu0 %v149
    %258 = vmatmul.mubr.f32.gmra.mxu0 %v148
    %v259 = vpop.f32.mrf.mxu0
    %v260 = vadd.f32 0.0, %v259
    %v261 = vpop.f32.mrf.mxu0
    %262 = vmatprep.mubr.f32.mxu0 %v152
    %263 = vmatmul.mubr.f32.gmra.mxu0 %v151
    %v264 = vpop.f32.mrf.mxu0
    %v265 = vadd.f32 0.0, %v264
    %v266 = vpop.f32.mrf.mxu0
    %267 = vdwg.mxu0
    %268 = vmatprep.subr.mxu0 0.0
    %269 = vmatpush1.msra.mxu0 0.0
    %270 = vmatprep.subr.mxu0 0.0
    %271 = vmatpush1.msra.mxu0 0.0
    %272 = vmatprep.subr.mxu0 0.0
    %273 = vmatpush1.msra.mxu0 0.0
    %274 = vmatprep.subr.mxu0 0.0
    %275 = vmatpush1.msra.mxu0 0.0
    %276 = vmatprep.subr.mxu0 0.0
    %277 = vmatpush1.msra.mxu0 0.0
    %278 = vmatprep.subr.mxu0 0.0
    %279 = vmatpush1.msra.mxu0 0.0
    %280 = vmatprep.subr.mxu0 0.0
    %281 = vmatpush1.msra.mxu0 0.0
    %282 = vmatprep.subr.mxu0 0.0
    %283 = vmatpush1.msra.mxu0 0.0
    %284 = vmatprep.subr.mxu0 0.0
    %285 = vmatpush1.msra.mxu0 0.0
    %286 = vmatprep.subr.mxu0 0.0
    %287 = vmatpush1.msra.mxu0 0.0
    %288 = vmatprep.subr.mxu0 0.0
    %289 = vmatpush1.msra.mxu0 0.0
    %290 = vmatprep.subr.mxu0 0.0
    %291 = vmatpush1.msra.mxu0 0.0
    %292 = vmatprep.subr.mxu0 0.0
    %293 = vmatpush1.msra.mxu0 0.0
    %294 = vmatprep.subr.mxu0 0.0
    %295 = vmatpush1.msra.mxu0 0.0
    %296 = vmatprep.subr.mxu0 0.0
    %297 = vmatpush1.msra.mxu0 0.0
    %298 = vmatprep.subr.mxu0 0.0
    %299 = vmatpush1.msra.mxu0 %v186
    %300 = vmatprep.subr.mxu0 0.0
    %301 = vmatpush2.msra.mxu0 0.0
    %302 = vmatprep.subr.mxu0 0.0
    %303 = vmatpush2.msra.mxu0 0.0
    %304 = vmatprep.subr.mxu0 0.0
    %305 = vmatpush2.msra.mxu0 0.0
    %306 = vmatprep.subr.mxu0 0.0
    %307 = vmatpush2.msra.mxu0 0.0
    %308 = vmatprep.subr.mxu0 0.0
    %309 = vmatpush2.msra.mxu0 0.0
    %310 = vmatprep.subr.mxu0 0.0
    %311 = vmatpush2.msra.mxu0 0.0
    %312 = vmatprep.subr.mxu0 0.0
    %313 = vmatpush2.msra.mxu0 0.0
    %314 = vmatprep.subr.mxu0 0.0
    %315 = vmatpush2.msra.mxu0 0.0
    %316 = vmatprep.subr.mxu0 0.0
    %317 = vmatpush2.msra.mxu0 0.0
    %318 = vmatprep.subr.mxu0 0.0
    %319 = vmatpush2.msra.mxu0 0.0
    %320 = vmatprep.subr.mxu0 0.0
    %321 = vmatpush2.msra.mxu0 0.0
    %322 = vmatprep.subr.mxu0 0.0
    %323 = vmatpush2.msra.mxu0 0.0
    %324 = vmatprep.subr.mxu0 0.0
    %325 = vmatpush2.msra.mxu0 0.0
    %326 = vmatprep.subr.mxu0 0.0
    %327 = vmatpush2.msra.mxu0 0.0
    %328 = vmatprep.subr.mxu0 0.0
    %329 = vmatpush2.msra.mxu0 0.0
    %330 = vmatprep.subr.mxu0 0.0
    %331 = vmatpush2.msra.mxu0 0.0
    %332 = vmatprep.mubr.f32.mxu0 0.0
    %333 = vmatmul.mubr.f32.gmra.mxu0 %v188
    %v334 = vpop.f32.mrf.mxu0
    %v335 = vadd.f32 %v260, %v334
    %v336 = vpop.f32.mrf.mxu0
    %337 = vmatprep.mubr.f32.mxu0 0.0
    %338 = vmatmul.mubr.f32.gmra.mxu0 %v191
    %v339 = vpop.f32.mrf.mxu0
    %v340 = vadd.f32 %v265, %v339
    %v341 = vpop.f32.mrf.mxu0
    %342 = vdwg.mxu0
    %v343 = vtanh.pop %v335
    %v344 = vtanh.pop %v340
    %345 = vst.msk [vmem:[#allocation5] sm:$0xff] %vm39, %v343
    %346 = vst.msk [vmem:[#allocation5 + $0x8] sm:$0xff] %vm39, %v344
    %v347 = vadd.f32 %v21, %v343
    %v348 = vadd.f32 %v22, %v344
    %349 = vst.msk [vmem:[#allocation3] sm:$0xff] %vm39, %v347
    %350 = vst.msk [vmem:[#allocation3 + $0x8] sm:$0xff] %vm39, %v348
    // Predicated region
    $region18: #{tpu_custom_call.1} parent=1 // pred_check
      _
    $region19: #{tpu_custom_call.1} parent=1 // pred_check_branch
      %352 = sbr.rel (0) target = $region21
    $region20: #{tpu_custom_call.1} parent=1 // pred_region
      %s354 = ssub.s32 256, 256
      %355 = vsyncadd [#allocation4], %s354
      %s356 = sshll.u32 [#allocation3], 4
      %s357 = int_to_ptr.vmem [resolvable:$true] %s356
      %362 = dma.vmem_to_hbm [thread:$0]  %s357, 256, %s4, [#allocation4], 128, 128, 8
    $region21: #{tpu_custom_call.1} parent=1 // pred_fallthru
      _
    // Predicated region
    $region22: #{tpu_custom_call.1} parent=1 // pred_check
      _
    $region23: #{tpu_custom_call.1} parent=1 // pred_check_branch
      %364 = sbr.rel (0) target = $region25
    $region24: #{tpu_custom_call.1} parent=1 // pred_region
      %s366 = ssub.s32 256, 256
      %367 = vsyncadd [#allocation6], %s366
      %s368 = sshll.u32 [#allocation5], 4
      %s369 = int_to_ptr.vmem [resolvable:$true] %s368
      %374 = dma.vmem_to_hbm [thread:$0]  %s369, 256, %s5, [#allocation6], 128, 128, 8
    $region25: #{tpu_custom_call.1} parent=1 // pred_fallthru
      _
    // Predicated region
    $region26: #{tpu_custom_call.1} parent=1 // pred_check
      _
    $region27: #{tpu_custom_call.1} parent=1 // pred_check_branch
      %376 = sbr.rel (0) target = $region29
    $region28: #{tpu_custom_call.1} parent=1 // pred_region
      %377 = dma.done [#allocation4], 256
    $region29: #{tpu_custom_call.1} parent=1 // pred_fallthru
      _
    // Predicated region
    $region30: #{tpu_custom_call.1} parent=1 // pred_check
      _
    $region31: #{tpu_custom_call.1} parent=1 // pred_check_branch
      %379 = sbr.rel (0) target = $region33
    $region32: #{tpu_custom_call.1} parent=1 // pred_region
      %380 = dma.done [#allocation6], 256
    $region33: #{tpu_custom_call.1} parent=1 // pred_fallthru
      _
    %381 = vsyncpa [#allocation4], 1
    %382 = vsyncpa [#allocation6], 1

</llo_original>
